<compile_context>
chip_gen: v7x
topology: tpu7x:2x2x1
jax: 0.10.0
libtpu: 0.0.40
codegen_flags: <defaults>
</compile_context>

<pallas_src>
import math

import jax
import jax.numpy as jnp
from jax.experimental import pallas as pl
from jax.experimental.pallas import tpu as pltpu

_LANE = 128
_MAX_TILE_ROWS = 2048  # (2048,128) f32 = 1 MiB per output buffer.


def _bcast_fill_kernel(coeff_ref, o_ref):
    # coeff_ref: SMEM (1,) f32 holding exp(log_random_coeff).
    c = coeff_ref[0]
    o_ref[...] = jnp.broadcast_to(c, o_ref.shape).astype(o_ref.dtype)


def random_force_coeff(v, log_random_coeff):
    """y = exp(log_random_coeff) * ones_like(v), via a Pallas TPU fill kernel."""
    shape = v.shape
    dtype = v.dtype
    n = math.prod(shape) if shape else 1

    # Scalar parameter transform (1 element) — done once, outside the grid loop.
    coeff = jnp.exp(log_random_coeff.reshape(-1)[:1].astype(jnp.float32))

    rows = pl.cdiv(n, _LANE)
    if rows <= _MAX_TILE_ROWS:
        tile_rows = rows            # full-extent block (allowed even if not %8)
    else:
        tile_rows = _MAX_TILE_ROWS  # (8,128)-aligned; partial tail block is masked
    grid = (pl.cdiv(rows, tile_rows),)

    slab = pl.pallas_call(
        _bcast_fill_kernel,
        out_shape=jax.ShapeDtypeStruct((rows, _LANE), dtype),
        grid_spec=pltpu.PrefetchScalarGridSpec(
            num_scalar_prefetch=0,
            grid=grid,
            in_specs=[pl.BlockSpec(memory_space=pltpu.MemorySpace.SMEM)],
            out_specs=pl.BlockSpec((tile_rows, _LANE), lambda i: (i, 0)),
        ),
        compiler_params=pltpu.CompilerParams(
            dimension_semantics=("parallel",),
        ),
    )(coeff)

    if rows * _LANE == n:
        return slab.reshape(shape)               # aligned: free metadata reshape
    return slab.reshape(-1)[:n].reshape(shape)   # unaligned tail: cheap slice


if __name__ == "__main__":
    key = jax.random.PRNGKey(0)
    # Small NCHW-like input; its values are irrelevant to the op (shape/dtype only).
    x = jax.random.normal(key, (2, 4, 16, 16), dtype=jnp.float32)
    log_random_coeff = jnp.array([-3.0], dtype=jnp.float32)  # nn.Parameter([-3.0])

    y = random_force_coeff(x, log_random_coeff)
    jax.block_until_ready(y)

    # Reference: torch forward = exp(log_random_coeff) * ones_like(v)
    y_ref = jnp.exp(log_random_coeff[0]) * jnp.ones_like(x)
    assert y.shape == x.shape and y.dtype == x.dtype
    assert jnp.max(jnp.abs(y - y_ref)) < 1e-6

    print("KERNEL_OK")
</pallas_src>

<mosaic_0001>
module attributes {stable_mosaic.version = 11 : i64} {
  func.func @_bcast_fill_kernel(%arg0: i32, %arg1: memref<1xf32, #tpu.memory_space<smem>>, %arg2: memref<16x128xf32, #tpu.memory_space<vmem>>) attributes {dimension_semantics = [#tpu.dimension_semantics<parallel>], iteration_bounds = array<i64: 1>, scalar_prefetch = 0 : i64, scratch_operands = 0 : i64, tpu.core_type = #tpu.core_type<tc>, window_params = [{transform_indices = @transform_0, window_bounds = array<i64: 1>}, {transform_indices = @transform_1, window_bounds = array<i64: 16, 128>}]} {
    %c0 = arith.constant 0 : index
    %0 = memref.load %arg1[%c0] : memref<1xf32, #tpu.memory_space<smem>>
    %1 = vector.broadcast %0 : f32 to vector<16x128xf32>
    %c0_0 = arith.constant 0 : index
    %c0_1 = arith.constant 0 : index
    %2 = vector.load %arg2[%c0_0, %c0_1] : memref<16x128xf32, #tpu.memory_space<vmem>>, vector<16x128xf32>
    tpu.vector_store %arg2[%c0_0, %c0_1], %1 {strides = array<i32>} : memref<16x128xf32, #tpu.memory_space<vmem>>, vector<16x128xf32>,
    return
  }
  func.func @transform_0(%arg0: i32) -> i32 {
    %c0_i32 = arith.constant 0 : i32
    %c0_i32_0 = arith.constant 0 : i32
    return %c0_i32 : i32
  }
  func.func @transform_1(%arg0: i32) -> (i32, i32) {
    %c0_i32 = arith.constant 0 : i32
    %c0_i32_0 = arith.constant 0 : i32
    return %arg0, %c0_i32 : i32, i32
  }
}

</mosaic_0001>

<llo_original>
// kernel: tpu_custom_call.1
$region0: #{tpu_custom_call.1}
  #allocation0 [shape = 'u32[]', space=smem, size = 0x4, offset = 0x4, fixed_abs, tag = 'smem constant byte address 0x4 - core index']
  #allocation1 [shape = 'u32[144,128]{1,0:T(1,128)}', space=vmem, size = 0x12000, scoped, tag = 'internal scratch']
  #allocation2 [shape = 'f32[1]{0:T(128)S(6)}', space=smem, size = 0x200, scoped, tag = 'scoped memory for tpu_custom_call.1']
  %s0 = inlined_call_operand.<no memory space> [shape: f32[1], index: 0, kind: input, shape index: {}]
  %s1 = inlined_call_operand.hbm [shape: f32[16,128], index: 1, kind: output, shape index: {}]
  %s2 = sld [smem:[#allocation0]]
  $region14: #{tpu_custom_call.1} parent=0
    _
  %s4 = ssub.s32 1, %s2
  %s5 = scalar_select 0, %s4, %s2
  %6 = sst [smem:[#allocation2]] %s0
  $region1: #{tpu_custom_call.1} parent=0
    #allocation3 [shape = 'u8[8192]{0}', space=vmem, size = 0x2000, scoped, tag = 'output window, operand 0, single buffered']
    #allocation4 [shape = 's32[1]{0}', space=sflag, size = 0x4, scoped, tag = 'scoped memory for tpu_custom_call.1']
    %7 = vsyncpa [#allocation4], 0
    // Predicated region
    $region2: #{tpu_custom_call.1} parent=1 // pred_check
      _
    $region3: #{tpu_custom_call.1} parent=1 // pred_check_branch
      %9 = sbr.rel (0) target = $region5
    $region4: #{tpu_custom_call.1} parent=1 // pred_region
      _
    $region5: #{tpu_custom_call.1} parent=1 // pred_fallthru
      _
    %s10 = sld [smem:[#allocation2]]
    %v11 = vstv %s10
    %12 = vst [vmem:[#allocation3] sm:$0xff] %v11
    %13 = vst [vmem:[#allocation3 + $0x8] sm:$0xff] %v11
    // Predicated region
    $region6: #{tpu_custom_call.1} parent=1 // pred_check
      _
    $region7: #{tpu_custom_call.1} parent=1 // pred_check_branch
      %15 = sbr.rel (0) target = $region9
    $region8: #{tpu_custom_call.1} parent=1 // pred_region
      %s17 = ssub.s32 256, 256
      %18 = vsyncadd [#allocation4], %s17
      %s19 = sshll.u32 [#allocation3], 4
      %s20 = int_to_ptr.vmem [resolvable:$true] %s19
      %25 = dma.vmem_to_hbm [thread:$0]  %s20, 256, %s1, [#allocation4], 128, 128, 8
    $region9: #{tpu_custom_call.1} parent=1 // pred_fallthru
      _
    // Predicated region
    $region10: #{tpu_custom_call.1} parent=1 // pred_check
      _
    $region11: #{tpu_custom_call.1} parent=1 // pred_check_branch
      %27 = sbr.rel (0) target = $region13
    $region12: #{tpu_custom_call.1} parent=1 // pred_region
      %28 = dma.done [#allocation4], 256
    $region13: #{tpu_custom_call.1} parent=1 // pred_fallthru
      _
    %29 = vsyncpa [#allocation4], 1

</llo_original>
